<compile_context>
chip_gen: v7x
topology: tpu7x:2x2x1
jax: 0.10.0
libtpu: 0.0.40
codegen_flags: <defaults>
</compile_context>

<pallas_src>
import jax
import jax.numpy as jnp
from jax.experimental import pallas as pl
from jax.experimental.pallas import tpu as pltpu

INV_SQRT2 = 0.7071067811865476


def _pick_tile(dim, preferred, candidates):
    """Largest aligned tile that evenly divides `dim` (falls back to full dim)."""
    if dim % preferred == 0:
        return preferred
    for c in candidates:
        if c <= dim and dim % c == 0:
            return c
    return dim


# ---------------------------------------------------------------------------
# Fused kernel: Linear+GELU  ->  LM head  ->  online cross-entropy
# ---------------------------------------------------------------------------
def _fused_forward_kernel(x_ref, w_in_ref, b_ref, w_lm_ref, lab_ref,
                          logits_ref, nll_ref,
                          h_sc, m_sc, l_sc, t_sc):
    j = pl.program_id(1)
    tn = logits_ref.shape[-1]

    # --- once per row tile: custom_linear (Linear -> Dropout(0) -> GELU),
    #     result kept resident in VMEM (bf16) for all vocab tiles.
    @pl.when(j == 0)
    def _():
        y = jnp.dot(x_ref[...], w_in_ref[...],
                    preferred_element_type=jnp.float32) + b_ref[...]
        h = 0.5 * y * (1.0 + jax.lax.erf(y * INV_SQRT2))   # exact erf GELU
        h_sc[...] = h.astype(h_sc.dtype)
        m_sc[...] = jnp.full_like(m_sc, -jnp.inf)
        l_sc[...] = jnp.zeros_like(l_sc)
        t_sc[...] = jnp.zeros_like(t_sc)

    # --- LM-head tile: [TM, TN] logits, bf16 MXU inputs, f32 accumulation.
    logits = jnp.dot(h_sc[...], w_lm_ref[...],
                     preferred_element_type=jnp.float32)
    logits_ref[...] = logits.astype(logits_ref.dtype)

    # --- target logit via iota == label (no materialized one-hot).
    col = j * tn + jax.lax.broadcasted_iota(jnp.int32, logits.shape, 1)
    is_tgt = col == lab_ref[...]                              # [TM,TN] vs [TM,1]
    t_sc[...] += jnp.sum(jnp.where(is_tgt, logits, 0.0), axis=-1, keepdims=True)

    # --- online (flash-style) logsumexp across vocab tiles.
    m_new = jnp.maximum(m_sc[...], jnp.max(logits, axis=-1, keepdims=True))
    l_sc[...] = (jnp.exp(m_sc[...] - m_new) * l_sc[...]
                 + jnp.sum(jnp.exp(logits - m_new), axis=-1, keepdims=True))
    m_sc[...] = m_new

    # --- finalize per-token NLL at the last vocab tile.
    @pl.when(j == pl.num_programs(1) - 1)
    def _():
        nll_ref[...] = (m_sc[...] + jnp.log(l_sc[...])) - t_sc[...]


def fused_forward(x, w_in, b_in, w_lm, labels, *, tm_pref=256, tn_pref=512):
    n, f = x.shape
    hdim = w_in.shape[1]
    v = w_lm.shape[1]

    tm = _pick_tile(n, tm_pref, (512, 256, 128, 64, 32, 16, 8))
    tn = _pick_tile(v, tn_pref, (1024, 512, 256, 128))
    grid = (n // tm, v // tn)

    grid_spec = pltpu.PrefetchScalarGridSpec(
        num_scalar_prefetch=0,
        grid=grid,
        in_specs=[
            pl.BlockSpec((tm, f), lambda i, j: (i, 0)),      # x rows (resident over j)
            pl.BlockSpec((f, hdim), lambda i, j: (0, 0)),    # w_in (resident)
            pl.BlockSpec((1, hdim), lambda i, j: (0, 0)),    # b_in (resident)
            pl.BlockSpec((hdim, tn), lambda i, j: (0, j)),   # w_lm vocab stream
            pl.BlockSpec((tm, 1), lambda i, j: (i, 0)),      # labels per row tile
        ],
        out_specs=(
            pl.BlockSpec((tm, tn), lambda i, j: (i, j)),     # logits tiles
            pl.BlockSpec((tm, 1), lambda i, j: (i, 0)),      # per-token NLL
        ),
        scratch_shapes=[
            pltpu.VMEM((tm, hdim), jnp.bfloat16),   # GELU activations (resident)
            pltpu.VMEM((tm, 1), jnp.float32),       # running max
            pltpu.VMEM((tm, 1), jnp.float32),       # running sum-exp
            pltpu.VMEM((tm, 1), jnp.float32),       # target-logit accumulator
        ],
    )

    return pl.pallas_call(
        _fused_forward_kernel,
        out_shape=(
            jax.ShapeDtypeStruct((n, v), jnp.float32),
            jax.ShapeDtypeStruct((n, 1), jnp.float32),
        ),
        grid_spec=grid_spec,
        compiler_params=pltpu.CompilerParams(
            dimension_semantics=("parallel", "arbitrary"),   # rows shard across TCs
            vmem_limit_bytes=64 * 1024 * 1024,               # safe on v5e/v6e/v7x
        ),
    )(x, w_in, b_in, w_lm, labels)


# ---------------------------------------------------------------------------
# Model wrapper
# ---------------------------------------------------------------------------
def snl_translation_forward(params, features, attention_mask, labels):
    b, l, f = features.shape
    n = b * l

    # bf16 MXU inputs, f32 accumulation inside the kernel.
    x = features.reshape(n, f).astype(jnp.bfloat16)
    w_in = params["w_in"].astype(jnp.bfloat16)
    b_in = params["b_in"].astype(jnp.float32)
    w_lm = params["w_lm"].astype(jnp.bfloat16)

    # glue kept from the reference forward
    attention_mask = attention_mask[:, :, 0]                  # [B, L]
    del attention_mask  # TODO(synk): consumed by the (untranslated) T5 body

    labels_flat = labels.reshape(n, 1).astype(jnp.int32)
    vocab = w_lm.shape[1]

    logits_flat, nll = fused_forward(x, w_in, b_in, w_lm, labels_flat)

    # torch-style ignore handling: labels < 0 (e.g. -100 padding) don't count.
    valid = (labels_flat[:, 0] >= 0).astype(jnp.float32)
    loss = jnp.sum(nll[:, 0] * valid) / jnp.maximum(jnp.sum(valid), 1.0)

    logits = logits_flat.reshape(b, l, vocab)
    return loss, logits


def init_params(key, feature_dim, hidden_dim, vocab_size):
    k1, k2, _ = jax.random.split(key, 3)
    scale_in = 1.0 / jnp.sqrt(feature_dim)
    scale_lm = 1.0 / jnp.sqrt(hidden_dim)
    return {
        "w_in": (jax.random.normal(k1, (feature_dim, hidden_dim), jnp.float32)
                 * scale_in),
        "b_in": jnp.zeros((1, hidden_dim), jnp.float32),
        "w_lm": (jax.random.normal(k2, (hidden_dim, vocab_size), jnp.float32)
                 * scale_lm),
    }


def _reference_forward(params, features, labels):
    """Pure-JAX reference with the same bf16-in / f32-accum numerics."""
    b, l, f = features.shape
    n = b * l
    x = features.reshape(n, f).astype(jnp.bfloat16)
    w_in = params["w_in"].astype(jnp.bfloat16)
    w_lm = params["w_lm"].astype(jnp.bfloat16)

    y = jnp.dot(x, w_in, preferred_element_type=jnp.float32) + params["b_in"]
    h = 0.5 * y * (1.0 + jax.lax.erf(y * INV_SQRT2))
    logits = jnp.dot(h.astype(jnp.bfloat16), w_lm,
                     preferred_element_type=jnp.float32)
    lse = jax.scipy.special.logsumexp(logits, axis=-1)
    tgt = jnp.take_along_axis(logits, labels.reshape(n, 1), axis=-1)[:, 0]
    loss = jnp.mean(lse - tgt)
    return loss, logits.reshape(b, l, -1)


if __name__ == "__main__":
    B, L, F, H, V = 2, 8, 32, 32, 128

    key = jax.random.PRNGKey(0)
    k_feat, k_lab, k_par = jax.random.split(key, 3)

    features = jax.random.normal(k_feat, (B, L, F), jnp.float32)
    attention_mask = jnp.ones((B, L, 3), jnp.float32)   # sliced [:, :, 0] in fwd
    labels = jax.random.randint(k_lab, (B, L), 0, V, jnp.int32)

    params = init_params(k_par, F, H, V)

    loss, logits = snl_translation_forward(params, features, attention_mask, labels)
    jax.block_until_ready((loss, logits))

    assert logits.shape == (B, L, V)
    assert loss.shape == ()

    # quick sanity check against a pure-JAX reference (same numerics)
    ref_loss, ref_logits = _reference_forward(params, features, labels)
    assert jnp.allclose(logits, ref_logits, rtol=2e-2, atol=2e-2)
    assert jnp.allclose(loss, ref_loss, rtol=2e-2, atol=2e-2)

    print("KERNEL_OK")
</pallas_src>

<mosaic_0001>
module attributes {stable_mosaic.version = 11 : i64} {
  func.func @_fused_forward_kernel(%arg0: i32, %arg1: i32, %arg2: memref<16x32xbf16, #tpu.memory_space<vmem>>, %arg3: memref<32x32xbf16, #tpu.memory_space<vmem>>, %arg4: memref<1x32xf32, #tpu.memory_space<vmem>>, %arg5: memref<32x128xbf16, #tpu.memory_space<vmem>>, %arg6: memref<16x1xi32, #tpu.memory_space<vmem>>, %arg7: memref<16x128xf32, #tpu.memory_space<vmem>>, %arg8: memref<16x1xf32, #tpu.memory_space<vmem>>, %arg9: memref<16x32xbf16, #tpu.memory_space<vmem>>, %arg10: memref<16x1xf32, #tpu.memory_space<vmem>>, %arg11: memref<16x1xf32, #tpu.memory_space<vmem>>, %arg12: memref<16x1xf32, #tpu.memory_space<vmem>>) attributes {dimension_semantics = [#tpu.dimension_semantics<parallel>, #tpu.dimension_semantics<arbitrary>], iteration_bounds = array<i64: 1, 1>, scalar_prefetch = 0 : i64, scratch_operands = 4 : i64, tpu.core_type = #tpu.core_type<tc>, window_params = [{transform_indices = @transform_0, window_bounds = array<i64: 16, 32>}, {pipeline_mode = #tpu.pipeline_mode<synchronous>, transform_indices = @transform_1, window_bounds = array<i64: 32, 32>}, {pipeline_mode = #tpu.pipeline_mode<synchronous>, transform_indices = @transform_2, window_bounds = array<i64: 1, 32>}, {transform_indices = @transform_3, window_bounds = array<i64: 32, 128>}, {transform_indices = @transform_4, window_bounds = array<i64: 16, 1>}, {transform_indices = @transform_5, window_bounds = array<i64: 16, 128>}, {transform_indices = @transform_6, window_bounds = array<i64: 16, 1>}]} {
    %c0_i32 = arith.constant 0 : i32
    %0 = arith.cmpi eq, %arg1, %c0_i32 : i32
    %1 = arith.extui %0 : i1 to i32
    %c0_i32_0 = arith.constant 0 : i32
    %2 = arith.cmpi ne, %1, %c0_i32_0 : i32
    scf.if %2 {
      %c0_28 = arith.constant 0 : index
      %c0_29 = arith.constant 0 : index
      %41 = vector.load %arg2[%c0_28, %c0_29] : memref<16x32xbf16, #tpu.memory_space<vmem>>, vector<16x32xbf16>
      %c0_30 = arith.constant 0 : index
      %c0_31 = arith.constant 0 : index
      %42 = vector.load %arg3[%c0_30, %c0_31] : memref<32x32xbf16, #tpu.memory_space<vmem>>, vector<32x32xbf16>
      %cst_32 = arith.constant dense<0.000000e+00> : vector<16x32xf32>
      %43 = tpu.matmul %41, %42, %cst_32 {dimension_numbers = #tpu.dot_dimension_numbers<[1], [0], [0], [1], [0, 0, 1, 1], [], []>} : vector<16x32xbf16>, vector<32x32xbf16>, vector<16x32xf32> -> vector<16x32xf32>
      %c0_33 = arith.constant 0 : index
      %c0_34 = arith.constant 0 : index
      %44 = vector.load %arg4[%c0_33, %c0_34] : memref<1x32xf32, #tpu.memory_space<vmem>>, vector<1x32xf32>
      %45 = vector.broadcast %44 : vector<1x32xf32> to vector<16x32xf32>
      %46 = arith.addf %43, %45 : vector<16x32xf32>
      %cst_35 = arith.constant 5.000000e-01 : f32
      %47 = vector.broadcast %cst_35 : f32 to vector<16x32xf32>
      %48 = arith.mulf %47, %46 : vector<16x32xf32>
      %cst_36 = arith.constant 0.707106769 : f32
      %49 = vector.broadcast %cst_36 : f32 to vector<16x32xf32>
      %50 = arith.mulf %46, %49 : vector<16x32xf32>
      %51 = math.erf %50 : vector<16x32xf32>
      %cst_37 = arith.constant 1.000000e+00 : f32
      %52 = vector.broadcast %cst_37 : f32 to vector<16x32xf32>
      %53 = arith.addf %52, %51 : vector<16x32xf32>
      %54 = arith.mulf %48, %53 : vector<16x32xf32>
      %55 = arith.truncf %54 : vector<16x32xf32> to vector<16x32xbf16>
      %c0_38 = arith.constant 0 : index
      %c0_39 = arith.constant 0 : index
      %56 = vector.load %arg9[%c0_38, %c0_39] : memref<16x32xbf16, #tpu.memory_space<vmem>>, vector<16x32xbf16>
      tpu.vector_store %arg9[%c0_38, %c0_39], %55 {strides = array<i32>} : memref<16x32xbf16, #tpu.memory_space<vmem>>, vector<16x32xbf16>,
      %cst_40 = arith.constant 0xFF800000 : f32
      %57 = vector.broadcast %cst_40 : f32 to vector<16x1xf32>
      %c0_41 = arith.constant 0 : index
      %c0_42 = arith.constant 0 : index
      %58 = vector.load %arg10[%c0_41, %c0_42] : memref<16x1xf32, #tpu.memory_space<vmem>>, vector<16x1xf32>
      tpu.vector_store %arg10[%c0_41, %c0_42], %57 {strides = array<i32>} : memref<16x1xf32, #tpu.memory_space<vmem>>, vector<16x1xf32>,
      %cst_43 = arith.constant 0.000000e+00 : f32
      %59 = vector.broadcast %cst_43 : f32 to vector<16x1xf32>
      %c0_44 = arith.constant 0 : index
      %c0_45 = arith.constant 0 : index
      %60 = vector.load %arg11[%c0_44, %c0_45] : memref<16x1xf32, #tpu.memory_space<vmem>>, vector<16x1xf32>
      tpu.vector_store %arg11[%c0_44, %c0_45], %59 {strides = array<i32>} : memref<16x1xf32, #tpu.memory_space<vmem>>, vector<16x1xf32>,
      %cst_46 = arith.constant 0.000000e+00 : f32
      %61 = vector.broadcast %cst_46 : f32 to vector<16x1xf32>
      %c0_47 = arith.constant 0 : index
      %c0_48 = arith.constant 0 : index
      %62 = vector.load %arg12[%c0_47, %c0_48] : memref<16x1xf32, #tpu.memory_space<vmem>>, vector<16x1xf32>
      tpu.vector_store %arg12[%c0_47, %c0_48], %61 {strides = array<i32>} : memref<16x1xf32, #tpu.memory_space<vmem>>, vector<16x1xf32>,
    } else {
    }
    %c0 = arith.constant 0 : index
    %c0_1 = arith.constant 0 : index
    %3 = vector.load %arg9[%c0, %c0_1] : memref<16x32xbf16, #tpu.memory_space<vmem>>, vector<16x32xbf16>
    %c0_2 = arith.constant 0 : index
    %c0_3 = arith.constant 0 : index
    %4 = vector.load %arg5[%c0_2, %c0_3] : memref<32x128xbf16, #tpu.memory_space<vmem>>, vector<32x128xbf16>
    %cst = arith.constant dense<0.000000e+00> : vector<16x128xf32>
    %5 = tpu.matmul %3, %4, %cst {dimension_numbers = #tpu.dot_dimension_numbers<[1], [0], [0], [1], [0, 0, 1, 1], [], []>} : vector<16x32xbf16>, vector<32x128xbf16>, vector<16x128xf32> -> vector<16x128xf32>
    %c0_4 = arith.constant 0 : index
    %c0_5 = arith.constant 0 : index
    %6 = vector.load %arg7[%c0_4, %c0_5] : memref<16x128xf32, #tpu.memory_space<vmem>>, vector<16x128xf32>
    tpu.vector_store %arg7[%c0_4, %c0_5], %5 {strides = array<i32>} : memref<16x128xf32, #tpu.memory_space<vmem>>, vector<16x128xf32>,
    %c128_i32 = arith.constant 128 : i32
    %7 = arith.muli %arg1, %c128_i32 : i32
    %8 = tpu.iota {dimensions = array<i32: 1>} : vector<16x128xi32>
    %9 = vector.broadcast %7 : i32 to vector<16x128xi32>
    %10 = arith.addi %9, %8 : vector<16x128xi32>
    %c0_6 = arith.constant 0 : index
    %c0_7 = arith.constant 0 : index
    %11 = vector.load %arg6[%c0_6, %c0_7] : memref<16x1xi32, #tpu.memory_space<vmem>>, vector<16x1xi32>
    %12 = vector.broadcast %11 : vector<16x1xi32> to vector<16x128xi32>
    %13 = arith.cmpi eq, %10, %12 : vector<16x128xi32>
    %c0_8 = arith.constant 0 : index
    %c0_9 = arith.constant 0 : index
    %14 = vector.load %arg12[%c0_8, %c0_9] : memref<16x1xf32, #tpu.memory_space<vmem>>, vector<16x1xf32>
    %cst_10 = arith.constant 0.000000e+00 : f32
    %15 = vector.broadcast %cst_10 : f32 to vector<16x128xf32>
    %16 = arith.select %13, %5, %15 : vector<16x128xi1>, vector<16x128xf32>
    %cst_11 = arith.constant dense<0.000000e+00> : vector<16xf32>
    %17 = vector.multi_reduction <add>, %16, %cst_11 [1] : vector<16x128xf32> to vector<16xf32>
    %18 = vector.shape_cast %17 : vector<16xf32> to vector<16x1xf32>
    %19 = arith.addf %14, %18 : vector<16x1xf32>
    %c0_12 = arith.constant 0 : index
    %c0_13 = arith.constant 0 : index
    %20 = vector.load %arg12[%c0_12, %c0_13] : memref<16x1xf32, #tpu.memory_space<vmem>>, vector<16x1xf32>
    tpu.vector_store %arg12[%c0_12, %c0_13], %19 {strides = array<i32>} : memref<16x1xf32, #tpu.memory_space<vmem>>, vector<16x1xf32>,
    %c0_14 = arith.constant 0 : index
    %c0_15 = arith.constant 0 : index
    %21 = vector.load %arg10[%c0_14, %c0_15] : memref<16x1xf32, #tpu.memory_space<vmem>>, vector<16x1xf32>
    %cst_16 = arith.constant dense<0xFF800000> : vector<16xf32>
    %22 = vector.multi_reduction <maximumf>, %5, %cst_16 [1] : vector<16x128xf32> to vector<16xf32>
    %23 = vector.shape_cast %22 : vector<16xf32> to vector<16x1xf32>
    %24 = arith.maximumf %21, %23 : vector<16x1xf32>
    %c0_17 = arith.constant 0 : index
    %c0_18 = arith.constant 0 : index
    %25 = vector.load %arg10[%c0_17, %c0_18] : memref<16x1xf32, #tpu.memory_space<vmem>>, vector<16x1xf32>
    %26 = arith.subf %25, %24 : vector<16x1xf32>
    %27 = math.exp %26 : vector<16x1xf32>
    %c0_19 = arith.constant 0 : index
    %c0_20 = arith.constant 0 : index
    %28 = vector.load %arg11[%c0_19, %c0_20] : memref<16x1xf32, #tpu.memory_space<vmem>>, vector<16x1xf32>
    %29 = arith.mulf %27, %28 : vector<16x1xf32>
    %30 = vector.broadcast %24 : vector<16x1xf32> to vector<16x128xf32>
    %31 = arith.subf %5, %30 : vector<16x128xf32>
    %32 = math.exp %31 : vector<16x128xf32>
    %cst_21 = arith.constant dense<0.000000e+00> : vector<16xf32>
    %33 = vector.multi_reduction <add>, %32, %cst_21 [1] : vector<16x128xf32> to vector<16xf32>
    %34 = vector.shape_cast %33 : vector<16xf32> to vector<16x1xf32>
    %35 = arith.addf %29, %34 : vector<16x1xf32>
    %c0_22 = arith.constant 0 : index
    %c0_23 = arith.constant 0 : index
    %36 = vector.load %arg11[%c0_22, %c0_23] : memref<16x1xf32, #tpu.memory_space<vmem>>, vector<16x1xf32>
    tpu.vector_store %arg11[%c0_22, %c0_23], %35 {strides = array<i32>} : memref<16x1xf32, #tpu.memory_space<vmem>>, vector<16x1xf32>,
    %c0_24 = arith.constant 0 : index
    %c0_25 = arith.constant 0 : index
    %37 = vector.load %arg10[%c0_24, %c0_25] : memref<16x1xf32, #tpu.memory_space<vmem>>, vector<16x1xf32>
    tpu.vector_store %arg10[%c0_24, %c0_25], %24 {strides = array<i32>} : memref<16x1xf32, #tpu.memory_space<vmem>>, vector<16x1xf32>,
    %c0_i32_26 = arith.constant 0 : i32
    %38 = arith.cmpi eq, %arg1, %c0_i32_26 : i32
    %39 = arith.extui %38 : i1 to i32
    %c0_i32_27 = arith.constant 0 : i32
    %40 = arith.cmpi ne, %39, %c0_i32_27 : i32
    scf.if %40 {
      %c0_28 = arith.constant 0 : index
      %c0_29 = arith.constant 0 : index
      %41 = vector.load %arg10[%c0_28, %c0_29] : memref<16x1xf32, #tpu.memory_space<vmem>>, vector<16x1xf32>
      %c0_30 = arith.constant 0 : index
      %c0_31 = arith.constant 0 : index
      %42 = vector.load %arg11[%c0_30, %c0_31] : memref<16x1xf32, #tpu.memory_space<vmem>>, vector<16x1xf32>
      %43 = math.log %42 : vector<16x1xf32>
      %44 = arith.addf %41, %43 : vector<16x1xf32>
      %c0_32 = arith.constant 0 : index
      %c0_33 = arith.constant 0 : index
      %45 = vector.load %arg12[%c0_32, %c0_33] : memref<16x1xf32, #tpu.memory_space<vmem>>, vector<16x1xf32>
      %46 = arith.subf %44, %45 : vector<16x1xf32>
      %c0_34 = arith.constant 0 : index
      %c0_35 = arith.constant 0 : index
      %47 = vector.load %arg8[%c0_34, %c0_35] : memref<16x1xf32, #tpu.memory_space<vmem>>, vector<16x1xf32>
      tpu.vector_store %arg8[%c0_34, %c0_35], %46 {strides = array<i32>} : memref<16x1xf32, #tpu.memory_space<vmem>>, vector<16x1xf32>,
    } else {
    }
    return
  }
  func.func @transform_0(%arg0: i32, %arg1: i32) -> (i32, i32) {
    %c0_i32 = arith.constant 0 : i32
    %c0_i32_0 = arith.constant 0 : i32
    return %arg0, %c0_i32 : i32, i32
  }
  func.func @transform_1(%arg0: i32, %arg1: i32) -> (i32, i32) {
    %c0_i32 = arith.constant 0 : i32
    %c0_i32_0 = arith.constant 0 : i32
    %c0_i32_1 = arith.constant 0 : i32
    return %c0_i32, %c0_i32_0 : i32, i32
  }
  func.func @transform_2(%arg0: i32, %arg1: i32) -> (i32, i32) {
    %c0_i32 = arith.constant 0 : i32
    %c0_i32_0 = arith.constant 0 : i32
    %c0_i32_1 = arith.constant 0 : i32
    return %c0_i32, %c0_i32_0 : i32, i32
  }
  func.func @transform_3(%arg0: i32, %arg1: i32) -> (i32, i32) {
    %c0_i32 = arith.constant 0 : i32
    %c0_i32_0 = arith.constant 0 : i32
    return %c0_i32, %arg1 : i32, i32
  }
  func.func @transform_4(%arg0: i32, %arg1: i32) -> (i32, i32) {
    %c0_i32 = arith.constant 0 : i32
    %c0_i32_0 = arith.constant 0 : i32
    return %arg0, %c0_i32 : i32, i32
  }
  func.func @transform_5(%arg0: i32, %arg1: i32) -> (i32, i32) {
    %c0_i32 = arith.constant 0 : i32
    return %arg0, %arg1 : i32, i32
  }
  func.func @transform_6(%arg0: i32, %arg1: i32) -> (i32, i32) {
    %c0_i32 = arith.constant 0 : i32
    %c0_i32_0 = arith.constant 0 : i32
    return %arg0, %c0_i32 : i32, i32
  }
}

</mosaic_0001>

<llo_original>
// kernel: tpu_custom_call.1
$region0: #{tpu_custom_call.1}
  #allocation0 [shape = 'u32[]', space=smem, size = 0x4, offset = 0x4, fixed_abs, tag = 'smem constant byte address 0x4 - core index']
  #allocation1 [shape = 'u32[144,128]{1,0:T(1,128)}', space=vmem, size = 0x12000, scoped, tag = 'internal scratch']
  #allocation2 [shape = 'bf16[16,32]{1,0:T(16,128)(2,1)}', space=vmem, size = 0x1000, scoped, tag = 'scratch operand']
  #allocation3 [shape = 'f32[16,1]{1,0:T(8,128)}', space=vmem, size = 0x2000, scoped, tag = 'scratch operand']
  #allocation4 [shape = 'f32[16,1]{1,0:T(8,128)}', space=vmem, size = 0x2000, scoped, tag = 'scratch operand']
  #allocation5 [shape = 'f32[16,1]{1,0:T(8,128)}', space=vmem, size = 0x2000, scoped, tag = 'scratch operand']
  %s0 = inlined_call_operand.hbm [shape: bf16[16,32], index: 0, kind: input, shape index: {}]
  %s1 = inlined_call_operand.hbm [shape: bf16[32,32], index: 1, kind: input, shape index: {}]
  %s2 = inlined_call_operand.hbm [shape: f32[1,32], index: 2, kind: input, shape index: {}]
  %s3 = inlined_call_operand.hbm [shape: bf16[32,128], index: 3, kind: input, shape index: {}]
  %s4 = inlined_call_operand.hbm [shape: s32[16,1], index: 4, kind: input, shape index: {}]
  %s5 = inlined_call_operand.hbm [shape: f32[16,128], index: 5, kind: output, shape index: {0}]
  %s6 = inlined_call_operand.hbm [shape: f32[16,1], index: 6, kind: output, shape index: {1}]
  %7 = xla_tuple %s5, %s6
  %s8 = sld [smem:[#allocation0]]
  $region66: #{tpu_custom_call.1} parent=0
    _
  %s10 = ssub.s32 1, %s8
  %s11 = scalar_select 0, %s10, %s8
  $region1: #{tpu_custom_call.1} parent=0
    #allocation6 [shape = 'u8[4096]{0}', space=vmem, size = 0x1000, scoped, tag = 'input window, operand 0, single buffered']
    #allocation7 [shape = 's32[1]{0}', space=sflag, size = 0x4, scoped, tag = 'scoped memory for tpu_custom_call.1']
    #allocation8 [shape = 's32[1]{0}', space=sflag, size = 0x4, scoped, tag = 'scoped memory for tpu_custom_call.1']
    #allocation9 [shape = 'u8[8192]{0}', space=vmem, size = 0x2000, scoped, tag = 'input window, operand 1, single buffered']
    #allocation10 [shape = 's32[1]{0}', space=sflag, size = 0x4, scoped, tag = 'scoped memory for tpu_custom_call.1']
    #allocation11 [shape = 'u8[512]{0}', space=vmem, size = 0x400, scoped, tag = 'input window, operand 2, single buffered']
    #allocation12 [shape = 'u8[8192]{0}', space=vmem, size = 0x2000, scoped, tag = 'input window, operand 3, single buffered']
    #allocation13 [shape = 's32[1]{0}', space=sflag, size = 0x4, scoped, tag = 'scoped memory for tpu_custom_call.1']
    #allocation14 [shape = 'u8[8192]{0}', space=vmem, size = 0x2000, scoped, tag = 'input window, operand 4, single buffered']
    #allocation15 [shape = 'u8[8192]{0}', space=vmem, size = 0x2000, scoped, tag = 'output window, operand 0, single buffered']
    #allocation16 [shape = 'u8[8192]{0}', space=vmem, size = 0x2000, scoped, tag = 'output window, operand 1, single buffered']
    #allocation17 [shape = 's32[1]{0}', space=sflag, size = 0x4, scoped, tag = 'scoped memory for tpu_custom_call.1']
    %12 = vsyncpa [#allocation7], 0
    %13 = vsyncpa [#allocation10], 0
    %14 = vsyncpa [#allocation13], 0
    %15 = vsyncpa [#allocation8], 0
    %16 = vsyncpa [#allocation17], 0
    // Predicated region
    $region2: #{tpu_custom_call.1} parent=1 // pred_check
      _
    $region3: #{tpu_custom_call.1} parent=1 // pred_check_branch
      %18 = sbr.rel (0) target = $region5
    $region4: #{tpu_custom_call.1} parent=1 // pred_region
      %s20 = ssub.s32 128, 128
      %21 = vsyncadd [#allocation7], %s20
      %s22 = sshll.u32 [#allocation6], 4
      %s23 = int_to_ptr.vmem [resolvable:$true] %s22
      %28 = dma.hbm_to_vmem [thread:$0]  %s0, 128, %s23, [#allocation7], 64, 64, 4
    $region5: #{tpu_custom_call.1} parent=1 // pred_fallthru
      _
    // Predicated region
    $region6: #{tpu_custom_call.1} parent=1 // pred_check
      _
    $region7: #{tpu_custom_call.1} parent=1 // pred_check_branch
      %30 = sbr.rel (0) target = $region9
    $region8: #{tpu_custom_call.1} parent=1 // pred_region
      %s32 = ssub.s32 256, 256
      %33 = vsyncadd [#allocation10], %s32
      %s34 = sshll.u32 [#allocation9], 4
      %s35 = int_to_ptr.vmem [resolvable:$true] %s34
      %40 = dma.hbm_to_vmem [thread:$0]  %s1, 256, %s35, [#allocation10], 64, 64, 4
    $region9: #{tpu_custom_call.1} parent=1 // pred_fallthru
      _
    // Predicated region
    $region10: #{tpu_custom_call.1} parent=1 // pred_check
      _
    $region11: #{tpu_custom_call.1} parent=1 // pred_check_branch
      %42 = sbr.rel (0) target = $region13
    $region12: #{tpu_custom_call.1} parent=1 // pred_region
      %s44 = ssub.s32 16, 16
      %45 = vsyncadd [#allocation10], %s44
      %s47 = sshll.u32 [#allocation11], 4
      %s48 = int_to_ptr.vmem [resolvable:$true] %s47
      %50 = dma.hbm_to_vmem [thread:$0]  %s2, 16, %s48, [#allocation10]
    $region13: #{tpu_custom_call.1} parent=1 // pred_fallthru
      _
    // Predicated region
    $region14: #{tpu_custom_call.1} parent=1 // pred_check
      _
    $region15: #{tpu_custom_call.1} parent=1 // pred_check_branch
      %52 = sbr.rel (0) target = $region17
    $region16: #{tpu_custom_call.1} parent=1 // pred_region
      %s54 = ssub.s32 256, 256
      %55 = vsyncadd [#allocation13], %s54
      %s56 = sshll.u32 [#allocation12], 4
      %s57 = int_to_ptr.vmem [resolvable:$true] %s56
      %62 = dma.hbm_to_vmem [thread:$0]  %s3, 256, %s57, [#allocation13], 64, 64, 4
    $region17: #{tpu_custom_call.1} parent=1 // pred_fallthru
      _
    // Predicated region
    $region18: #{tpu_custom_call.1} parent=1 // pred_check
      _
    $region19: #{tpu_custom_call.1} parent=1 // pred_check_branch
      %64 = sbr.rel (0) target = $region21
    $region20: #{tpu_custom_call.1} parent=1 // pred_region
      %s66 = ssub.s32 256, 256
      %67 = vsyncadd [#allocation13], %s66
      %s68 = sshll.u32 [#allocation14], 4
      %s69 = int_to_ptr.vmem [resolvable:$true] %s68
      %74 = dma.hbm_to_vmem [thread:$0]  %s4, 256, %s69, [#allocation13], 128, 128, 8
    $region21: #{tpu_custom_call.1} parent=1 // pred_fallthru
      _
    // Predicated region
    $region22: #{tpu_custom_call.1} parent=1 // pred_check
      _
    $region23: #{tpu_custom_call.1} parent=1 // pred_check_branch
      %76 = sbr.rel (0) target = $region25
    $region24: #{tpu_custom_call.1} parent=1 // pred_region
      %77 = dma.done [#allocation7], 128
    $region25: #{tpu_custom_call.1} parent=1 // pred_fallthru
      _
    // Predicated region
    $region26: #{tpu_custom_call.1} parent=1 // pred_check
      _
    $region27: #{tpu_custom_call.1} parent=1 // pred_check_branch
      %79 = sbr.rel (0) target = $region29
    $region28: #{tpu_custom_call.1} parent=1 // pred_region
      %80 = dma.done [#allocation10], 256
    $region29: #{tpu_custom_call.1} parent=1 // pred_fallthru
      _
    // Predicated region
    $region30: #{tpu_custom_call.1} parent=1 // pred_check
      _
    $region31: #{tpu_custom_call.1} parent=1 // pred_check_branch
      %82 = sbr.rel (0) target = $region33
    $region32: #{tpu_custom_call.1} parent=1 // pred_region
      %83 = dma.done [#allocation10], 16
    $region33: #{tpu_custom_call.1} parent=1 // pred_fallthru
      _
    // Predicated region
    $region34: #{tpu_custom_call.1} parent=1 // pred_check
      _
    $region35: #{tpu_custom_call.1} parent=1 // pred_check_branch
      %85 = sbr.rel (0) target = $region37
    $region36: #{tpu_custom_call.1} parent=1 // pred_region
      %86 = dma.done [#allocation13], 256
    $region37: #{tpu_custom_call.1} parent=1 // pred_fallthru
      _
    // Predicated region
    $region38: #{tpu_custom_call.1} parent=1 // pred_check
      _
    $region39: #{tpu_custom_call.1} parent=1 // pred_check_branch
      %88 = sbr.rel (0) target = $region41
    $region40: #{tpu_custom_call.1} parent=1 // pred_region
      %89 = dma.done [#allocation13], 256
    $region41: #{tpu_custom_call.1} parent=1 // pred_fallthru
      _
    %p91 = scmp.eq.s32.totalorder 0, 0
    // Predicated region
    $region42: #{tpu_custom_call.1} parent=1 // pred_check
      %p92 = pneg %p91
    $region43: #{tpu_custom_call.1} parent=1 // pred_check_branch
      %94 = sbr.rel (%p92) target = $region45
    $region44: #{tpu_custom_call.1} parent=1 // pred_region
      %v95 = vld [vmem:[#allocation6] sm:$0xf]
      %v96 = vld [vmem:[#allocation6 + $0x4] sm:$0xf]
      %v97 = vld [vmem:[#allocation9] sm:$0xf]
      %v98 = vld [vmem:[#allocation9 + $0x4] sm:$0xf]
      %v99 = vld [vmem:[#allocation9 + $0x8] sm:$0xf]
      %v100 = vld [vmem:[#allocation9 + $0xc] sm:$0xf]
      %v101 = vld [vmem:[#allocation11] sm:$0x1]
      %v103 = vlaneseq
      %v104 = vshrl.u32 %v103, 7
      %v105 = vsub.s32 0, %v104
      %v106 = vrot.slane %v101, %v105
      %v110 = vunpack.c.l.b16 %v95
      %v111 = vunpack.c.l.b16 %v96
      %v112 = vpack.c.b16 %v111, %v110
      %v117 = vunpack.c.l.b16 %v97
      %v118 = vunpack.c.l.b16 %v98
      %v119 = vunpack.c.l.b16 %v99
      %v120 = vunpack.c.l.b16 %v100
      %v121 = vpack.c.b16 %v118, %v117
      %v122 = vpack.c.b16 %v120, %v119
      %vm125 = vcmask 261120
      %v127 = vsel %vm125, %v112, 0
      %129 = vmatprep.subr.bf16.mxu0 0
      %130 = vmatpush1.bf16.msra.mxu0 %v121
      %131 = vmatprep.subr.bf16.mxu0 0
      %132 = vmatpush1.bf16.msra.mxu0 %v122
      %133 = vmatprep.subr.bf16.mxu0 0
      %134 = vmatpush1.bf16.msra.mxu0 0
      %135 = vmatprep.subr.bf16.mxu0 0
      %136 = vmatpush1.bf16.msra.mxu0 0
      %137 = vmatprep.subr.bf16.mxu0 0
      %138 = vmatpush1.bf16.msra.mxu0 0
      %139 = vmatprep.subr.bf16.mxu0 0
      %140 = vmatpush1.bf16.msra.mxu0 0
      %141 = vmatprep.subr.bf16.mxu0 0
      %142 = vmatpush1.bf16.msra.mxu0 0
      %143 = vmatprep.subr.bf16.mxu0 0
      %144 = vmatpush1.bf16.msra.mxu0 0
      %145 = vmatprep.subr.bf16.mxu0 0
      %146 = vmatpush1.bf16.msra.mxu0 0
      %147 = vmatprep.subr.bf16.mxu0 0
      %148 = vmatpush1.bf16.msra.mxu0 0
      %149 = vmatprep.subr.bf16.mxu0 0
      %150 = vmatpush1.bf16.msra.mxu0 0
      %151 = vmatprep.subr.bf16.mxu0 0
      %152 = vmatpush1.bf16.msra.mxu0 0
      %153 = vmatprep.subr.bf16.mxu0 0
      %154 = vmatpush1.bf16.msra.mxu0 0
      %155 = vmatprep.subr.bf16.mxu0 0
      %156 = vmatpush1.bf16.msra.mxu0 0
      %157 = vmatprep.subr.bf16.mxu0 0
      %158 = vmatpush1.bf16.msra.mxu0 0
      %159 = vmatprep.subr.bf16.mxu0 0
      %160 = vmatpush1.bf16.msra.mxu0 0
      %161 = vmatprep.mubr.bf16.mxu0 0
      %162 = vmatmul.mubr.bf16.gmra.mrb[0].mxu0 %v127
      %v163 = vpop.f32.mrb[0].mxu0
      %v164 = vadd.f32 %v106, %v163
      %v165 = vpop.f32.mrb[0].mxu0
      %v166 = vpop.f32.mrb[0].mxu0
      %v167 = vadd.f32 %v106, %v166
      %v168 = vpop.f32.mrb[0].mxu0
      %169 = vdwg.mxu0
      %v170 = vmul.f32 %v164, 0.5
      %v171 = vmul.f32 %v167, 0.5
      %v172 = vmul.f32 %v164, 0.70710677
      %v173 = vmul.f32 %v167, 0.70710677
      %v174 = verf.f32.pop %v172
      %v175 = verf.f32.pop %v173
      %v176 = vadd.f32 %v174, 1.0
      %v177 = vadd.f32 %v175, 1.0
      %v178 = vmul.f32 %v170, %v176
      %v179 = vmul.f32 %v171, %v177
      %v180 = vpack.c.bf16 %v179, %v178
      %181 = vst.msk [vmem:[#allocation2] sm:$0xff] %vm125, %v180
      %vm182 = vcmask 7168
      %183 = vst.msk [vmem:[#allocation3] sm:$0xff] %vm182, -inf
      %184 = vst.msk [vmem:[#allocation3 + $0x8] sm:$0xff] %vm182, -inf
      %185 = vst.msk [vmem:[#allocation4] sm:$0xff] %vm182, 0.0
      %186 = vst.msk [vmem:[#allocation4 + $0x8] sm:$0xff] %vm182, 0.0
      %187 = vst.msk [vmem:[#allocation5] sm:$0xff] %vm182, 0.0
      %188 = vst.msk [vmem:[#allocation5 + $0x8] sm:$0xff] %vm182, 0.0
    $region45: #{tpu_custom_call.1} parent=1 // pred_fallthru
      _
    %v189 = vld [vmem:[#allocation2] sm:$0xff]
    %v190 = vld [vmem:[#allocation12] sm:$0xf]
    %v191 = vld [vmem:[#allocation12 + $0x4] sm:$0xf]
    %v192 = vld [vmem:[#allocation12 + $0x8] sm:$0xf]
    %v193 = vld [vmem:[#allocation12 + $0xc] sm:$0xf]
    %v198 = vunpack.c.l.b16 %v190
    %v199 = vunpack.c.l.b16 %v191
    %v200 = vunpack.c.l.b16 %v192
    %v201 = vunpack.c.l.b16 %v193
    %v202 = vpack.c.b16 %v199, %v198
    %v203 = vpack.c.b16 %v201, %v200
    %vm206 = vcmask 261120
    %v208 = vsel %vm206, %v189, 0
    %210 = vmatprep.subr.bf16.mxu0 0
    %211 = vmatpush1.bf16.msra.mxu0 %v202
    %212 = vmatprep.subr.bf16.mxu0 0
    %213 = vmatpush1.bf16.msra.mxu0 %v203
    %214 = vmatprep.subr.bf16.mxu0 0
    %215 = vmatpush1.bf16.msra.mxu0 0
    %216 = vmatprep.subr.bf16.mxu0 0
    %217 = vmatpush1.bf16.msra.mxu0 0
    %218 = vmatprep.subr.bf16.mxu0 0
    %219 = vmatpush1.bf16.msra.mxu0 0
    %220 = vmatprep.subr.bf16.mxu0 0
    %221 = vmatpush1.bf16.msra.mxu0 0
    %222 = vmatprep.subr.bf16.mxu0 0
    %223 = vmatpush1.bf16.msra.mxu0 0
    %224 = vmatprep.subr.bf16.mxu0 0
    %225 = vmatpush1.bf16.msra.mxu0 0
    %226 = vmatprep.subr.bf16.mxu0 0
    %227 = vmatpush1.bf16.msra.mxu0 0
    %228 = vmatprep.subr.bf16.mxu0 0
    %229 = vmatpush1.bf16.msra.mxu0 0
    %230 = vmatprep.subr.bf16.mxu0 0
    %231 = vmatpush1.bf16.msra.mxu0 0
    %232 = vmatprep.subr.bf16.mxu0 0
    %233 = vmatpush1.bf16.msra.mxu0 0
    %234 = vmatprep.subr.bf16.mxu0 0
    %235 = vmatpush1.bf16.msra.mxu0 0
    %236 = vmatprep.subr.bf16.mxu0 0
    %237 = vmatpush1.bf16.msra.mxu0 0
    %238 = vmatprep.subr.bf16.mxu0 0
    %239 = vmatpush1.bf16.msra.mxu0 0
    %240 = vmatprep.subr.bf16.mxu0 0
    %241 = vmatpush1.bf16.msra.mxu0 0
    %242 = vmatprep.mubr.bf16.mxu0 0
    %243 = vmatmul.mubr.bf16.gmra.mrb[0].mxu0 %v208
    %v244 = vpop.f32.mrb[0].mxu0
    %v245 = vadd.f32 0.0, %v244
    %v246 = vpop.f32.mrb[0].mxu0
    %v247 = vpop.f32.mrb[0].mxu0
    %v248 = vadd.f32 0.0, %v247
    %v249 = vpop.f32.mrb[0].mxu0
    %250 = vdwg.mxu0
    %251 = vst [vmem:[#allocation15] sm:$0xff] %v245
    %252 = vst [vmem:[#allocation15 + $0x8] sm:$0xff] %v248
    %s253 = smul.u32 0, 128
    %v254 = vlaneseq
    %v255 = vand.u32 %v254, 127
    %v256 = vstv %s253
    %v257 = vadd.s32 %v256, %v255
    %v258 = vld [vmem:[#allocation14] sm:$0xff]
    %v259 = vld [vmem:[#allocation14 + $0x8] sm:$0xff]
    %260 = vset.pattern.permute.xlu0 0
    %261 = vperm.xlu0 %260, %v258
    %v262 = vpop.permute.xlu0 %261
    %263 = vset.pattern.permute.xlu0 0
    %264 = vperm.xlu0 %263, %v259
    %v265 = vpop.permute.xlu0 %264
    %vm266 = vcmp.eq.s32.totalorder %v257, %v262
    %vm267 = vcmp.eq.s32.totalorder %v257, %v265
    %v268 = vld [vmem:[#allocation5] sm:$0xff]
    %v269 = vld [vmem:[#allocation5 + $0x8] sm:$0xff]
    %v270 = vsel %vm266, %v245, 0.0
    %v271 = vsel %vm267, %v248, 0.0
    %272 = vadd.xlane.f32.xlu0 %v270
    %v273 = vpop.xlane.xlu0 %272
    %274 = vadd.xlane.f32.xlu0 %v271
    %v275 = vpop.xlane.xlu0 %274
    %v276 = vadd.f32 %v268, %v273
    %v277 = vadd.f32 %v269, %v275
    %vm278 = vcmask 7168
    %279 = vst.msk [vmem:[#allocation5] sm:$0xff] %vm278, %v276
    %280 = vst.msk [vmem:[#allocation5 + $0x8] sm:$0xff] %vm278, %v277
    %v281 = vld [vmem:[#allocation3] sm:$0xff]
    %v282 = vld [vmem:[#allocation3 + $0x8] sm:$0xff]
    %283 = vmax.xlane.f32.xlu0 %v245
    %v284 = vpop.xlane.xlu0 %283
    %285 = vmax.xlane.f32.xlu0 %v248
    %v286 = vpop.xlane.xlu0 %285
    %v287 = vmax.f32 %v281, %v284
    %v288 = vmax.f32 %v282, %v286
    %v289 = vsub.f32 %v281, %v287
    %v290 = vsub.f32 %v282, %v288
    %v291 = vmul.f32 %v289, 1.442695
    %v292 = vpow.pop %v291
    %v293 = vmul.f32 %v290, 1.442695
    %v294 = vpow.pop %v293
    %v295 = vld [vmem:[#allocation4] sm:$0xff]
    %v296 = vld [vmem:[#allocation4 + $0x8] sm:$0xff]
    %v297 = vmul.f32 %v292, %v295
    %v298 = vmul.f32 %v294, %v296
    %300 = vset.pattern.permute.xlu0 0
    %301 = vperm.xlu0 %300, %v287
    %v302 = vpop.permute.xlu0 %301
    %305 = vset.pattern.permute.xlu0 0
    %306 = vperm.xlu0 %305, %v288
    %v307 = vpop.permute.xlu0 %306
    %v309 = vsub.f32 %v245, %v302
    %v310 = vsub.f32 %v248, %v307
    %v311 = vmul.f32 %v309, 1.442695
    %v312 = vpow.pop %v311
    %v313 = vmul.f32 %v310, 1.442695
    %v314 = vpow.pop %v313
    %315 = vadd.xlane.f32.xlu0 %v312
    %v316 = vpop.xlane.xlu0 %315
    %317 = vadd.xlane.f32.xlu0 %v314
    %v318 = vpop.xlane.xlu0 %317
    %v319 = vadd.f32 %v297, %v316
    %v320 = vadd.f32 %v298, %v318
    %321 = vst.msk [vmem:[#allocation4] sm:$0xff] %vm278, %v319
    %322 = vst.msk [vmem:[#allocation4 + $0x8] sm:$0xff] %vm278, %v320
    %323 = vst.msk [vmem:[#allocation3] sm:$0xff] %vm278, %v287
    %324 = vst.msk [vmem:[#allocation3 + $0x8] sm:$0xff] %vm278, %v288
    // Predicated region
    $region46: #{tpu_custom_call.1} parent=1 // pred_check
      %p325 = pneg %p91
    $region47: #{tpu_custom_call.1} parent=1 // pred_check_branch
      %327 = sbr.rel (%p325) target = $region49
    $region48: #{tpu_custom_call.1} parent=1 // pred_region
      %v328 = vld [vmem:[#allocation3] sm:$0xff]
      %v329 = vld [vmem:[#allocation3 + $0x8] sm:$0xff]
      %v330 = vld [vmem:[#allocation4] sm:$0xff]
      %v331 = vld [vmem:[#allocation4 + $0x8] sm:$0xff]
      %v332 = vlog2.pop %v330
      %v333 = vmul.f32 %v332, 0.6931472
      %v334 = vlog2.pop %v331
      %v335 = vmul.f32 %v334, 0.6931472
      %v336 = vadd.f32 %v328, %v333
      %v337 = vadd.f32 %v329, %v335
      %v338 = vld [vmem:[#allocation5] sm:$0xff]
      %v339 = vld [vmem:[#allocation5 + $0x8] sm:$0xff]
      %v340 = vsub.f32 %v336, %v338
      %v341 = vsub.f32 %v337, %v339
      %342 = vst.msk [vmem:[#allocation16] sm:$0xff] %vm278, %v340
      %343 = vst.msk [vmem:[#allocation16 + $0x8] sm:$0xff] %vm278, %v341
    $region49: #{tpu_custom_call.1} parent=1 // pred_fallthru
      _
    // Predicated region
    $region50: #{tpu_custom_call.1} parent=1 // pred_check
      _
    $region51: #{tpu_custom_call.1} parent=1 // pred_check_branch
      %345 = sbr.rel (0) target = $region53
    $region52: #{tpu_custom_call.1} parent=1 // pred_region
      %s347 = ssub.s32 256, 256
      %348 = vsyncadd [#allocation8], %s347
      %s349 = sshll.u32 [#allocation15], 4
      %s350 = int_to_ptr.vmem [resolvable:$true] %s349
      %355 = dma.vmem_to_hbm [thread:$0]  %s350, 256, %s5, [#allocation8], 128, 128, 8
    $region53: #{tpu_custom_call.1} parent=1 // pred_fallthru
      _
    // Predicated region
    $region54: #{tpu_custom_call.1} parent=1 // pred_check
      _
    $region55: #{tpu_custom_call.1} parent=1 // pred_check_branch
      %357 = sbr.rel (0) target = $region57
    $region56: #{tpu_custom_call.1} parent=1 // pred_region
      %s359 = ssub.s32 256, 256
      %360 = vsyncadd [#allocation17], %s359
      %s361 = sshll.u32 [#allocation16], 4
      %s362 = int_to_ptr.vmem [resolvable:$true] %s361
      %367 = dma.vmem_to_hbm [thread:$0]  %s362, 256, %s6, [#allocation17], 128, 128, 8
    $region57: #{tpu_custom_call.1} parent=1 // pred_fallthru
      _
    // Predicated region
    $region58: #{tpu_custom_call.1} parent=1 // pred_check
      _
    $region59: #{tpu_custom_call.1} parent=1 // pred_check_branch
      %369 = sbr.rel (0) target = $region61
    $region60: #{tpu_custom_call.1} parent=1 // pred_region
      %370 = dma.done [#allocation8], 256
    $region61: #{tpu_custom_call.1} parent=1 // pred_fallthru
      _
    // Predicated region
    $region62: #{tpu_custom_call.1} parent=1 // pred_check
      _
    $region63: #{tpu_custom_call.1} parent=1 // pred_check_branch
      %372 = sbr.rel (0) target = $region65
    $region64: #{tpu_custom_call.1} parent=1 // pred_region
      %373 = dma.done [#allocation17], 256
    $region65: #{tpu_custom_call.1} parent=1 // pred_fallthru
      _
    %374 = vsyncpa [#allocation7], 1
    %375 = vsyncpa [#allocation10], 1
    %376 = vsyncpa [#allocation13], 1
    %377 = vsyncpa [#allocation8], 1
    %378 = vsyncpa [#allocation17], 1

</llo_original>
